<compile_context>
chip_gen: v5e
topology: v5e:2x2
jax: 0.10.0
libtpu: 0.0.40
codegen_flags: <defaults>
</compile_context>

<pallas_src>
import functools

import jax
import jax.numpy as jnp
from jax.experimental import pallas as pl
from jax.experimental.pallas import tpu as pltpu

N_IN = 2
HIDDEN = 16
N_CLASSES = 7
_SLAB_ROWS = 96          # packed parameter slab: (96, 16) f32 (~6 KB)
_NEG_SENTINEL = -1e30    # bias of the padded (8th) class row -> softmax prob 0


def _mlp_kernel(x_ref, p_ref, o_ref):
    f32 = jnp.float32
    x = x_ref[...].astype(f32)                       # (block_b, 2), batch-major

    # ---- static views into the packed parameter slab (one input pipeline) ----
    w1t = p_ref[0:2, :]                              # (2, 16)   W1^T
    b1r = p_ref[2:3, :]                              # (1, 16)   b1 as a row
    w2 = p_ref[8:24, :]                              # (16, 16)
    w3 = p_ref[24:40, :]
    w4 = p_ref[40:56, :]
    w5 = p_ref[56:72, :]
    w6p = p_ref[72:80, :]                            # (8, 16)   W6 padded with a zero row
    b2 = p_ref[80:96, 0:1]                           # (16, 1)
    b3 = p_ref[80:96, 1:2]
    b4 = p_ref[80:96, 2:3]
    b5 = p_ref[80:96, 3:4]
    b6p = p_ref[80:88, 4:5]                          # (8, 1)    b6 padded with -1e30

    # ---- Layer 1 (K=2): VPU broadcast FMAs in the input's native layout ----
    g = x[:, 0:1] * w1t[0:1, :] + x[:, 1:2] * w1t[1:2, :] + b1r   # (block_b, 16)
    g = jnp.maximum(g, 0.0)

    # ---- Layer 2: batch-major -> class-major switch folded into the MXU
    #      matmul (NT contraction), keeping batch on the 128-lane axis. ----
    h = jax.lax.dot_general(w2, g, (((1,), (1,)), ((), ())),
                            preferred_element_type=f32) + b2       # (16, block_b)
    h = jnp.maximum(h, 0.0)

    # ---- Layers 3..5: canonical (16,16) @ (16, block_b) on the MXU ----
    for w, b in ((w3, b3), (w4, b4), (w5, b5)):
        h = jnp.dot(w, h, preferred_element_type=f32) + b
        h = jnp.maximum(h, 0.0)

    # ---- Output layer: classes padded 7 -> 8 (sentinel row -> prob 0) ----
    logits = jnp.dot(w6p, h, preferred_element_type=f32) + b6p     # (8, block_b)

    # ---- Softmax over the class (sublane) axis ----
    m = jnp.max(logits, axis=0, keepdims=True)        # (1, block_b)
    e = jnp.exp(logits - m)                           # sentinel row: exp(-huge) == 0
    den = jnp.sum(e, axis=0, keepdims=True)
    probs = e / den                                   # (8, block_b)

    # ---- One aligned XLU transpose so the store is already torch (B, 7) ----
    o_ref[...] = jnp.transpose(probs)[:, 0:N_CLASSES].astype(o_ref.dtype)


def init_params(key):
    """Deterministic params matching torch.nn.Linear defaults (w: (out,in), b: (out,))."""
    sizes = [(N_IN, HIDDEN)] + [(HIDDEN, HIDDEN)] * 4 + [(HIDDEN, N_CLASSES)]
    params = []
    for fin, fout in sizes:
        kw, kb, key = jax.random.split(key, 3)
        bound = 1.0 / (fin ** 0.5)
        w = jax.random.uniform(kw, (fout, fin), jnp.float32, -bound, bound)
        b = jax.random.uniform(kb, (fout,), jnp.float32, -bound, bound)
        params.append((w, b))
    return params


def pack_params(params):
    """Pack the 6 (w, b) pairs into one (96, 16) f32 slab (single DMA pipeline)."""
    (w1, b1), (w2, b2), (w3, b3), (w4, b4), (w5, b5), (w6, b6) = params
    slab = jnp.zeros((_SLAB_ROWS, HIDDEN), jnp.float32)
    slab = slab.at[0:2, :].set(w1.T)                 # W1^T
    slab = slab.at[2, :].set(b1)                     # b1 as a row
    slab = slab.at[8:24, :].set(w2)
    slab = slab.at[24:40, :].set(w3)
    slab = slab.at[40:56, :].set(w4)
    slab = slab.at[56:72, :].set(w5)
    slab = slab.at[72:79, :].set(w6)                 # W6; row 79 stays zero (pad class)
    slab = slab.at[80:96, 0:4].set(jnp.stack([b2, b3, b4, b5], axis=1))
    slab = slab.at[80:87, 4].set(b6)
    slab = slab.at[87, 4].set(_NEG_SENTINEL)         # pad-class bias -> prob exactly 0
    return slab


def _pick_block_b(batch):
    """One grid step per TensorCore (2 on v7x megacore), capped to avoid vreg spills."""
    try:
        kind = jax.devices()[0].device_kind.lower()
    except Exception:  # pragma: no cover
        kind = ""
    num_cores = 2 if "v7" in kind else 1
    per_core = pl.cdiv(max(int(batch), 1), num_cores)
    block_b = pl.cdiv(per_core, 128) * 128
    return int(max(128, min(block_b, 2048)))


@functools.partial(jax.jit, static_argnames=("block_b",))
def _forward_impl(x, param_slab, block_b):
    B = x.shape[0]
    b_pad = pl.cdiv(B, block_b) * block_b
    x = x.astype(jnp.float32)
    if b_pad != B:
        x = jnp.pad(x, ((0, b_pad - B), (0, 0)))

    cost = pl.CostEstimate(
        flops=int(b_pad) * 2400,                       # ~2.4 KFLOP per sample
        transcendentals=int(b_pad) * 8,                # softmax exps
        bytes_accessed=int(b_pad) * (N_IN + N_CLASSES) * 4 + _SLAB_ROWS * HIDDEN * 4,
    )
    out = pl.pallas_call(
        _mlp_kernel,
        out_shape=jax.ShapeDtypeStruct((b_pad, N_CLASSES), jnp.float32),
        grid_spec=pltpu.PrefetchScalarGridSpec(
            num_scalar_prefetch=0,
            grid=(b_pad // block_b,),
            in_specs=[
                pl.BlockSpec((block_b, N_IN), lambda i: (i, 0)),        # native (B, 2)
                pl.BlockSpec((_SLAB_ROWS, HIDDEN), lambda i: (0, 0)),   # whole param slab
            ],
            out_specs=pl.BlockSpec((block_b, N_CLASSES), lambda i: (i, 0)),
        ),
        compiler_params=pltpu.CompilerParams(
            dimension_semantics=("parallel",)),
        cost_estimate=cost,
    )(x, param_slab)

    if b_pad != B:
        out = out[:B]
    return out


def discriminator_forward(x, param_slab, block_b=None):
    if block_b is None:
        block_b = _pick_block_b(x.shape[0])
    return _forward_impl(x, param_slab, block_b)


def reference_forward(x, params):
    h = x
    for w, b in params[:-1]:
        h = jnp.maximum(h @ w.T + b, 0.0)
    w, b = params[-1]
    return jax.nn.softmax(h @ w.T + b, axis=1)


if __name__ == "__main__":
    key = jax.random.PRNGKey(0)
    kx, kp = jax.random.split(key)

    B = 256
    x = jax.random.normal(kx, (B, N_IN), jnp.float32)
    params = init_params(kp)
    param_slab = pack_params(params)

    out = jax.block_until_ready(discriminator_forward(x, param_slab))

    ref = reference_forward(x, params)
    assert out.shape == (B, N_CLASSES)
    assert jnp.allclose(out, ref, atol=1e-5, rtol=1e-5), "mismatch vs reference"
    # rows of a softmax must sum to 1
    assert jnp.allclose(jnp.sum(out, axis=1), jnp.ones((B,)), atol=1e-5)

    print("KERNEL_OK")
</pallas_src>

<mosaic_0001>
module attributes {stable_mosaic.version = 11 : i64} {
  func.func @_mlp_kernel(%arg0: i32, %arg1: memref<256x2xf32, #tpu.memory_space<vmem>>, %arg2: memref<96x16xf32, #tpu.memory_space<vmem>>, %arg3: memref<256x7xf32, #tpu.memory_space<vmem>>) attributes {dimension_semantics = [#tpu.dimension_semantics<parallel>], iteration_bounds = array<i64: 1>, scalar_prefetch = 0 : i64, scratch_operands = 0 : i64, tpu.core_type = #tpu.core_type<tc>, window_params = [{transform_indices = @transform_0, window_bounds = array<i64: 256, 2>}, {pipeline_mode = #tpu.pipeline_mode<synchronous>, transform_indices = @transform_1, window_bounds = array<i64: 96, 16>}, {transform_indices = @transform_2, window_bounds = array<i64: 256, 7>}]} {
    %c0 = arith.constant 0 : index
    %c0_0 = arith.constant 0 : index
    %0 = vector.load %arg1[%c0, %c0_0] : memref<256x2xf32, #tpu.memory_space<vmem>>, vector<256x2xf32>
    %c0_1 = arith.constant 0 : index
    %c0_2 = arith.constant 0 : index
    %1 = vector.load %arg2[%c0_1, %c0_2] : memref<96x16xf32, #tpu.memory_space<vmem>>, vector<2x16xf32>
    %c2 = arith.constant 2 : index
    %c0_3 = arith.constant 0 : index
    %2 = vector.load %arg2[%c2, %c0_3] : memref<96x16xf32, #tpu.memory_space<vmem>>, vector<1x16xf32>
    %c8 = arith.constant 8 : index
    %c0_4 = arith.constant 0 : index
    %3 = vector.load %arg2[%c8, %c0_4] : memref<96x16xf32, #tpu.memory_space<vmem>>, vector<16x16xf32>
    %c24 = arith.constant 24 : index
    %c0_5 = arith.constant 0 : index
    %4 = vector.load %arg2[%c24, %c0_5] : memref<96x16xf32, #tpu.memory_space<vmem>>, vector<16x16xf32>
    %c40 = arith.constant 40 : index
    %c0_6 = arith.constant 0 : index
    %5 = vector.load %arg2[%c40, %c0_6] : memref<96x16xf32, #tpu.memory_space<vmem>>, vector<16x16xf32>
    %c56 = arith.constant 56 : index
    %c0_7 = arith.constant 0 : index
    %6 = vector.load %arg2[%c56, %c0_7] : memref<96x16xf32, #tpu.memory_space<vmem>>, vector<16x16xf32>
    %c72 = arith.constant 72 : index
    %c0_8 = arith.constant 0 : index
    %7 = vector.load %arg2[%c72, %c0_8] : memref<96x16xf32, #tpu.memory_space<vmem>>, vector<8x16xf32>
    %c80 = arith.constant 80 : index
    %c0_9 = arith.constant 0 : index
    %8 = vector.load %arg2[%c80, %c0_9] : memref<96x16xf32, #tpu.memory_space<vmem>>, vector<16x1xf32>
    %c80_10 = arith.constant 80 : index
    %c1 = arith.constant 1 : index
    %9 = vector.load %arg2[%c80_10, %c1] : memref<96x16xf32, #tpu.memory_space<vmem>>, vector<16x1xf32>
    %c80_11 = arith.constant 80 : index
    %c2_12 = arith.constant 2 : index
    %10 = vector.load %arg2[%c80_11, %c2_12] : memref<96x16xf32, #tpu.memory_space<vmem>>, vector<16x1xf32>
    %c80_13 = arith.constant 80 : index
    %c3 = arith.constant 3 : index
    %11 = vector.load %arg2[%c80_13, %c3] : memref<96x16xf32, #tpu.memory_space<vmem>>, vector<16x1xf32>
    %c80_14 = arith.constant 80 : index
    %c4 = arith.constant 4 : index
    %12 = vector.load %arg2[%c80_14, %c4] : memref<96x16xf32, #tpu.memory_space<vmem>>, vector<8x1xf32>
    %13 = vector.extract_strided_slice %0 {offsets = [0, 0], sizes = [256, 1], strides = [1, 1]} : vector<256x2xf32> to vector<256x1xf32>
    %14 = vector.extract_strided_slice %1 {offsets = [0, 0], sizes = [1, 16], strides = [1, 1]} : vector<2x16xf32> to vector<1x16xf32>
    %15 = vector.broadcast %13 : vector<256x1xf32> to vector<256x16xf32>
    %16 = vector.broadcast %14 : vector<1x16xf32> to vector<256x16xf32>
    %17 = arith.mulf %15, %16 : vector<256x16xf32>
    %18 = vector.extract_strided_slice %0 {offsets = [0, 1], sizes = [256, 1], strides = [1, 1]} : vector<256x2xf32> to vector<256x1xf32>
    %19 = vector.extract_strided_slice %1 {offsets = [1, 0], sizes = [1, 16], strides = [1, 1]} : vector<2x16xf32> to vector<1x16xf32>
    %20 = vector.broadcast %18 : vector<256x1xf32> to vector<256x16xf32>
    %21 = vector.broadcast %19 : vector<1x16xf32> to vector<256x16xf32>
    %22 = arith.mulf %20, %21 : vector<256x16xf32>
    %23 = arith.addf %17, %22 : vector<256x16xf32>
    %24 = vector.broadcast %2 : vector<1x16xf32> to vector<256x16xf32>
    %25 = arith.addf %23, %24 : vector<256x16xf32>
    %cst = arith.constant 0.000000e+00 : f32
    %26 = vector.broadcast %cst : f32 to vector<256x16xf32>
    %27 = arith.maximumf %25, %26 : vector<256x16xf32>
    %cst_15 = arith.constant dense<0.000000e+00> : vector<16x256xf32>
    %28 = tpu.matmul %3, %27, %cst_15 {dimension_numbers = #tpu.dot_dimension_numbers<[1], [1], [0], [0], [0, 0, 1, 0], [], []>} : vector<16x16xf32>, vector<256x16xf32>, vector<16x256xf32> -> vector<16x256xf32>
    %29 = vector.broadcast %8 : vector<16x1xf32> to vector<16x256xf32>
    %30 = arith.addf %28, %29 : vector<16x256xf32>
    %cst_16 = arith.constant 0.000000e+00 : f32
    %31 = vector.broadcast %cst_16 : f32 to vector<16x256xf32>
    %32 = arith.maximumf %30, %31 : vector<16x256xf32>
    %cst_17 = arith.constant dense<0.000000e+00> : vector<16x256xf32>
    %33 = tpu.matmul %4, %32, %cst_17 {dimension_numbers = #tpu.dot_dimension_numbers<[1], [0], [0], [1], [0, 0, 1, 1], [], []>} : vector<16x16xf32>, vector<16x256xf32>, vector<16x256xf32> -> vector<16x256xf32>
    %34 = vector.broadcast %9 : vector<16x1xf32> to vector<16x256xf32>
    %35 = arith.addf %33, %34 : vector<16x256xf32>
    %cst_18 = arith.constant 0.000000e+00 : f32
    %36 = vector.broadcast %cst_18 : f32 to vector<16x256xf32>
    %37 = arith.maximumf %35, %36 : vector<16x256xf32>
    %cst_19 = arith.constant dense<0.000000e+00> : vector<16x256xf32>
    %38 = tpu.matmul %5, %37, %cst_19 {dimension_numbers = #tpu.dot_dimension_numbers<[1], [0], [0], [1], [0, 0, 1, 1], [], []>} : vector<16x16xf32>, vector<16x256xf32>, vector<16x256xf32> -> vector<16x256xf32>
    %39 = vector.broadcast %10 : vector<16x1xf32> to vector<16x256xf32>
    %40 = arith.addf %38, %39 : vector<16x256xf32>
    %cst_20 = arith.constant 0.000000e+00 : f32
    %41 = vector.broadcast %cst_20 : f32 to vector<16x256xf32>
    %42 = arith.maximumf %40, %41 : vector<16x256xf32>
    %cst_21 = arith.constant dense<0.000000e+00> : vector<16x256xf32>
    %43 = tpu.matmul %6, %42, %cst_21 {dimension_numbers = #tpu.dot_dimension_numbers<[1], [0], [0], [1], [0, 0, 1, 1], [], []>} : vector<16x16xf32>, vector<16x256xf32>, vector<16x256xf32> -> vector<16x256xf32>
    %44 = vector.broadcast %11 : vector<16x1xf32> to vector<16x256xf32>
    %45 = arith.addf %43, %44 : vector<16x256xf32>
    %cst_22 = arith.constant 0.000000e+00 : f32
    %46 = vector.broadcast %cst_22 : f32 to vector<16x256xf32>
    %47 = arith.maximumf %45, %46 : vector<16x256xf32>
    %cst_23 = arith.constant dense<0.000000e+00> : vector<8x256xf32>
    %48 = tpu.matmul %7, %47, %cst_23 {dimension_numbers = #tpu.dot_dimension_numbers<[1], [0], [0], [1], [0, 0, 1, 1], [], []>} : vector<8x16xf32>, vector<16x256xf32>, vector<8x256xf32> -> vector<8x256xf32>
    %49 = vector.broadcast %12 : vector<8x1xf32> to vector<8x256xf32>
    %50 = arith.addf %48, %49 : vector<8x256xf32>
    %cst_24 = arith.constant dense<0xFF800000> : vector<256xf32>
    %51 = vector.multi_reduction <maximumf>, %50, %cst_24 [0] : vector<8x256xf32> to vector<256xf32>
    %52 = vector.shape_cast %51 : vector<256xf32> to vector<1x256xf32>
    %53 = vector.broadcast %52 : vector<1x256xf32> to vector<8x256xf32>
    %54 = arith.subf %50, %53 : vector<8x256xf32>
    %55 = math.exp %54 : vector<8x256xf32>
    %cst_25 = arith.constant dense<0.000000e+00> : vector<256xf32>
    %56 = vector.multi_reduction <add>, %55, %cst_25 [0] : vector<8x256xf32> to vector<256xf32>
    %57 = vector.shape_cast %56 : vector<256xf32> to vector<1x256xf32>
    %58 = vector.broadcast %57 : vector<1x256xf32> to vector<8x256xf32>
    %59 = arith.divf %55, %58 : vector<8x256xf32>
    %60 = tpu.transpose %59, [1, 0] : vector<8x256xf32> -> vector<256x8xf32>
    %61 = vector.extract_strided_slice %60 {offsets = [0, 0], sizes = [256, 7], strides = [1, 1]} : vector<256x8xf32> to vector<256x7xf32>
    %c0_26 = arith.constant 0 : index
    %c0_27 = arith.constant 0 : index
    %62 = vector.load %arg3[%c0_26, %c0_27] : memref<256x7xf32, #tpu.memory_space<vmem>>, vector<256x7xf32>
    tpu.vector_store %arg3[%c0_26, %c0_27], %61 {strides = array<i32>} : memref<256x7xf32, #tpu.memory_space<vmem>>, vector<256x7xf32>,
    return
  }
  func.func @transform_0(%arg0: i32) -> (i32, i32) {
    %c0_i32 = arith.constant 0 : i32
    %c0_i32_0 = arith.constant 0 : i32
    return %arg0, %c0_i32 : i32, i32
  }
  func.func @transform_1(%arg0: i32) -> (i32, i32) {
    %c0_i32 = arith.constant 0 : i32
    %c0_i32_0 = arith.constant 0 : i32
    %c0_i32_1 = arith.constant 0 : i32
    return %c0_i32, %c0_i32_0 : i32, i32
  }
  func.func @transform_2(%arg0: i32) -> (i32, i32) {
    %c0_i32 = arith.constant 0 : i32
    %c0_i32_0 = arith.constant 0 : i32
    return %arg0, %c0_i32 : i32, i32
  }
}

</mosaic_0001>

<llo_original>
// kernel: _forward_impl.1
$region0: #{_forward_impl.1}
  #allocation0 [shape = 'u32[]', space=smem, size = 0x4, offset = 0x4, fixed_abs, tag = 'smem constant byte address 0x4 - core index']
  #allocation1 [shape = 'u32[72,128]{1,0:T(1,128)}', space=vmem, size = 0x9000, scoped, tag = 'internal scratch']
  %s0 = inlined_call_operand.vmem [shape: f32[256,2], index: 0, kind: input, shape index: {}]
  %s1 = inlined_call_operand.vmem [shape: f32[96,16], index: 1, kind: input, shape index: {}]
  %s2 = inlined_call_operand.vmem [shape: f32[256,7], index: 2, kind: output, shape index: {}]
  %s3 = sld [smem:[#allocation0]]
  $region18: #{_forward_impl.1} parent=0
    _
  %s5 = ssub.s32 1, %s3
  %s6 = scalar_select 0, %s5, %s3
  // Predicated region
  $region2: #{_forward_impl.1} parent=0 // pred_check
    _
  $region3: #{_forward_impl.1} parent=0 // pred_check_branch
    %8 = sbr.rel (0) target = $region5
  $region4: #{_forward_impl.1} parent=0 // pred_region
    _
  $region5: #{_forward_impl.1} parent=0 // pred_fallthru
    _
  // Predicated region
  $region6: #{_forward_impl.1} parent=0 // pred_check
    _
  $region7: #{_forward_impl.1} parent=0 // pred_check_branch
    %10 = sbr.rel (0) target = $region9
  $region8: #{_forward_impl.1} parent=0 // pred_region
    _
  $region9: #{_forward_impl.1} parent=0 // pred_fallthru
    _
  %v11 = vld [vmem:[%s0] sm:$0xff]
  %v12 = vld [vmem:[%s0 + $0x8] sm:$0xff]
  %v13 = vld [vmem:[%s0 + $0x10] sm:$0xff]
  %v14 = vld [vmem:[%s0 + $0x18] sm:$0xff]
  %v15 = vld [vmem:[%s0 + $0x20] sm:$0xff]
  %v16 = vld [vmem:[%s0 + $0x28] sm:$0xff]
  %v17 = vld [vmem:[%s0 + $0x30] sm:$0xff]
  %v18 = vld [vmem:[%s0 + $0x38] sm:$0xff]
  %v19 = vld [vmem:[%s0 + $0x40] sm:$0xff]
  %v20 = vld [vmem:[%s0 + $0x48] sm:$0xff]
  %v21 = vld [vmem:[%s0 + $0x50] sm:$0xff]
  %v22 = vld [vmem:[%s0 + $0x58] sm:$0xff]
  %v23 = vld [vmem:[%s0 + $0x60] sm:$0xff]
  %v24 = vld [vmem:[%s0 + $0x68] sm:$0xff]
  %v25 = vld [vmem:[%s0 + $0x70] sm:$0xff]
  %v26 = vld [vmem:[%s0 + $0x78] sm:$0xff]
  %v27 = vld [vmem:[%s0 + $0x80] sm:$0xff]
  %v28 = vld [vmem:[%s0 + $0x88] sm:$0xff]
  %v29 = vld [vmem:[%s0 + $0x90] sm:$0xff]
  %v30 = vld [vmem:[%s0 + $0x98] sm:$0xff]
  %v31 = vld [vmem:[%s0 + $0xa0] sm:$0xff]
  %v32 = vld [vmem:[%s0 + $0xa8] sm:$0xff]
  %v33 = vld [vmem:[%s0 + $0xb0] sm:$0xff]
  %v34 = vld [vmem:[%s0 + $0xb8] sm:$0xff]
  %v35 = vld [vmem:[%s0 + $0xc0] sm:$0xff]
  %v36 = vld [vmem:[%s0 + $0xc8] sm:$0xff]
  %v37 = vld [vmem:[%s0 + $0xd0] sm:$0xff]
  %v38 = vld [vmem:[%s0 + $0xd8] sm:$0xff]
  %v39 = vld [vmem:[%s0 + $0xe0] sm:$0xff]
  %v40 = vld [vmem:[%s0 + $0xe8] sm:$0xff]
  %v41 = vld [vmem:[%s0 + $0xf0] sm:$0xff]
  %v42 = vld [vmem:[%s0 + $0xf8] sm:$0xff]
  %v43 = vld [vmem:[%s1] sm:$0x3]
  %v44 = vld [vmem:[%s1 + $0x2] sm:$0x1]
  %v45 = vld [vmem:[%s1 + $0x8] sm:$0xff]
  %v46 = vld [vmem:[%s1 + $0x10] sm:$0xff]
  %v47 = vld [vmem:[%s1 + $0x18] sm:$0xff]
  %v48 = vld [vmem:[%s1 + $0x20] sm:$0xff]
  %v49 = vld [vmem:[%s1 + $0x28] sm:$0xff]
  %v50 = vld [vmem:[%s1 + $0x30] sm:$0xff]
  %v51 = vld [vmem:[%s1 + $0x38] sm:$0xff]
  %v52 = vld [vmem:[%s1 + $0x40] sm:$0xff]
  %v53 = vld [vmem:[%s1 + $0x48] sm:$0xff]
  %v54 = vld [vmem:[%s1 + $0x50] sm:$0xff]
  %v55 = vld [vmem:[%s1 + $0x58] sm:$0xff]
  %57 = vset.pattern.permute.xlu0 0
  %58 = vperm.xlu0 %57, %v11
  %v59 = vpop.permute.xlu0 %58
  %62 = vset.pattern.permute.xlu0 0
  %63 = vperm.xlu0 %62, %v12
  %v64 = vpop.permute.xlu0 %63
  %67 = vset.pattern.permute.xlu0 0
  %68 = vperm.xlu0 %67, %v13
  %v69 = vpop.permute.xlu0 %68
  %72 = vset.pattern.permute.xlu0 0
  %73 = vperm.xlu0 %72, %v14
  %v74 = vpop.permute.xlu0 %73
  %77 = vset.pattern.permute.xlu0 0
  %78 = vperm.xlu0 %77, %v15
  %v79 = vpop.permute.xlu0 %78
  %82 = vset.pattern.permute.xlu0 0
  %83 = vperm.xlu0 %82, %v16
  %v84 = vpop.permute.xlu0 %83
  %87 = vset.pattern.permute.xlu0 0
  %88 = vperm.xlu0 %87, %v17
  %v89 = vpop.permute.xlu0 %88
  %92 = vset.pattern.permute.xlu0 0
  %93 = vperm.xlu0 %92, %v18
  %v94 = vpop.permute.xlu0 %93
  %97 = vset.pattern.permute.xlu0 0
  %98 = vperm.xlu0 %97, %v19
  %v99 = vpop.permute.xlu0 %98
  %102 = vset.pattern.permute.xlu0 0
  %103 = vperm.xlu0 %102, %v20
  %v104 = vpop.permute.xlu0 %103
  %107 = vset.pattern.permute.xlu0 0
  %108 = vperm.xlu0 %107, %v21
  %v109 = vpop.permute.xlu0 %108
  %112 = vset.pattern.permute.xlu0 0
  %113 = vperm.xlu0 %112, %v22
  %v114 = vpop.permute.xlu0 %113
  %117 = vset.pattern.permute.xlu0 0
  %118 = vperm.xlu0 %117, %v23
  %v119 = vpop.permute.xlu0 %118
  %122 = vset.pattern.permute.xlu0 0
  %123 = vperm.xlu0 %122, %v24
  %v124 = vpop.permute.xlu0 %123
  %127 = vset.pattern.permute.xlu0 0
  %128 = vperm.xlu0 %127, %v25
  %v129 = vpop.permute.xlu0 %128
  %132 = vset.pattern.permute.xlu0 0
  %133 = vperm.xlu0 %132, %v26
  %v134 = vpop.permute.xlu0 %133
  %137 = vset.pattern.permute.xlu0 0
  %138 = vperm.xlu0 %137, %v27
  %v139 = vpop.permute.xlu0 %138
  %142 = vset.pattern.permute.xlu0 0
  %143 = vperm.xlu0 %142, %v28
  %v144 = vpop.permute.xlu0 %143
  %147 = vset.pattern.permute.xlu0 0
  %148 = vperm.xlu0 %147, %v29
  %v149 = vpop.permute.xlu0 %148
  %152 = vset.pattern.permute.xlu0 0
  %153 = vperm.xlu0 %152, %v30
  %v154 = vpop.permute.xlu0 %153
  %157 = vset.pattern.permute.xlu0 0
  %158 = vperm.xlu0 %157, %v31
  %v159 = vpop.permute.xlu0 %158
  %162 = vset.pattern.permute.xlu0 0
  %163 = vperm.xlu0 %162, %v32
  %v164 = vpop.permute.xlu0 %163
  %167 = vset.pattern.permute.xlu0 0
  %168 = vperm.xlu0 %167, %v33
  %v169 = vpop.permute.xlu0 %168
  %172 = vset.pattern.permute.xlu0 0
  %173 = vperm.xlu0 %172, %v34
  %v174 = vpop.permute.xlu0 %173
  %177 = vset.pattern.permute.xlu0 0
  %178 = vperm.xlu0 %177, %v35
  %v179 = vpop.permute.xlu0 %178
  %182 = vset.pattern.permute.xlu0 0
  %183 = vperm.xlu0 %182, %v36
  %v184 = vpop.permute.xlu0 %183
  %187 = vset.pattern.permute.xlu0 0
  %188 = vperm.xlu0 %187, %v37
  %v189 = vpop.permute.xlu0 %188
  %192 = vset.pattern.permute.xlu0 0
  %193 = vperm.xlu0 %192, %v38
  %v194 = vpop.permute.xlu0 %193
  %197 = vset.pattern.permute.xlu0 0
  %198 = vperm.xlu0 %197, %v39
  %v199 = vpop.permute.xlu0 %198
  %202 = vset.pattern.permute.xlu0 0
  %203 = vperm.xlu0 %202, %v40
  %v204 = vpop.permute.xlu0 %203
  %207 = vset.pattern.permute.xlu0 0
  %208 = vperm.xlu0 %207, %v41
  %v209 = vpop.permute.xlu0 %208
  %212 = vset.pattern.permute.xlu0 0
  %213 = vperm.xlu0 %212, %v42
  %v214 = vpop.permute.xlu0 %213
  %v216 = vperm.slane %v43, 0
  %v217 = vmul.f32 %v59, %v216
  %v218 = vmul.f32 %v64, %v216
  %v219 = vmul.f32 %v69, %v216
  %v220 = vmul.f32 %v74, %v216
  %v221 = vmul.f32 %v79, %v216
  %v222 = vmul.f32 %v84, %v216
  %v223 = vmul.f32 %v89, %v216
  %v224 = vmul.f32 %v94, %v216
  %v225 = vmul.f32 %v99, %v216
  %v226 = vmul.f32 %v104, %v216
  %v227 = vmul.f32 %v109, %v216
  %v228 = vmul.f32 %v114, %v216
  %v229 = vmul.f32 %v119, %v216
  %v230 = vmul.f32 %v124, %v216
  %v231 = vmul.f32 %v129, %v216
  %v232 = vmul.f32 %v134, %v216
  %v233 = vmul.f32 %v139, %v216
  %v234 = vmul.f32 %v144, %v216
  %v235 = vmul.f32 %v149, %v216
  %v236 = vmul.f32 %v154, %v216
  %v237 = vmul.f32 %v159, %v216
  %v238 = vmul.f32 %v164, %v216
  %v239 = vmul.f32 %v169, %v216
  %v240 = vmul.f32 %v174, %v216
  %v241 = vmul.f32 %v179, %v216
  %v242 = vmul.f32 %v184, %v216
  %v243 = vmul.f32 %v189, %v216
  %v244 = vmul.f32 %v194, %v216
  %v245 = vmul.f32 %v199, %v216
  %v246 = vmul.f32 %v204, %v216
  %v247 = vmul.f32 %v209, %v216
  %v248 = vmul.f32 %v214, %v216
  %249 = vset.pattern.permute.xlu0 1
  %250 = vperm.xlu0 %249, %v11
  %v251 = vpop.permute.xlu0 %250
  %253 = vset.pattern.permute.xlu0 1
  %254 = vperm.xlu0 %253, %v12
  %v255 = vpop.permute.xlu0 %254
  %257 = vset.pattern.permute.xlu0 1
  %258 = vperm.xlu0 %257, %v13
  %v259 = vpop.permute.xlu0 %258
  %261 = vset.pattern.permute.xlu0 1
  %262 = vperm.xlu0 %261, %v14
  %v263 = vpop.permute.xlu0 %262
  %265 = vset.pattern.permute.xlu0 1
  %266 = vperm.xlu0 %265, %v15
  %v267 = vpop.permute.xlu0 %266
  %269 = vset.pattern.permute.xlu0 1
  %270 = vperm.xlu0 %269, %v16
  %v271 = vpop.permute.xlu0 %270
  %273 = vset.pattern.permute.xlu0 1
  %274 = vperm.xlu0 %273, %v17
  %v275 = vpop.permute.xlu0 %274
  %277 = vset.pattern.permute.xlu0 1
  %278 = vperm.xlu0 %277, %v18
  %v279 = vpop.permute.xlu0 %278
  %281 = vset.pattern.permute.xlu0 1
  %282 = vperm.xlu0 %281, %v19
  %v283 = vpop.permute.xlu0 %282
  %285 = vset.pattern.permute.xlu0 1
  %286 = vperm.xlu0 %285, %v20
  %v287 = vpop.permute.xlu0 %286
  %289 = vset.pattern.permute.xlu0 1
  %290 = vperm.xlu0 %289, %v21
  %v291 = vpop.permute.xlu0 %290
  %293 = vset.pattern.permute.xlu0 1
  %294 = vperm.xlu0 %293, %v22
  %v295 = vpop.permute.xlu0 %294
  %297 = vset.pattern.permute.xlu0 1
  %298 = vperm.xlu0 %297, %v23
  %v299 = vpop.permute.xlu0 %298
  %301 = vset.pattern.permute.xlu0 1
  %302 = vperm.xlu0 %301, %v24
  %v303 = vpop.permute.xlu0 %302
  %305 = vset.pattern.permute.xlu0 1
  %306 = vperm.xlu0 %305, %v25
  %v307 = vpop.permute.xlu0 %306
  %309 = vset.pattern.permute.xlu0 1
  %310 = vperm.xlu0 %309, %v26
  %v311 = vpop.permute.xlu0 %310
  %313 = vset.pattern.permute.xlu0 1
  %314 = vperm.xlu0 %313, %v27
  %v315 = vpop.permute.xlu0 %314
  %317 = vset.pattern.permute.xlu0 1
  %318 = vperm.xlu0 %317, %v28
  %v319 = vpop.permute.xlu0 %318
  %321 = vset.pattern.permute.xlu0 1
  %322 = vperm.xlu0 %321, %v29
  %v323 = vpop.permute.xlu0 %322
  %325 = vset.pattern.permute.xlu0 1
  %326 = vperm.xlu0 %325, %v30
  %v327 = vpop.permute.xlu0 %326
  %329 = vset.pattern.permute.xlu0 1
  %330 = vperm.xlu0 %329, %v31
  %v331 = vpop.permute.xlu0 %330
  %333 = vset.pattern.permute.xlu0 1
  %334 = vperm.xlu0 %333, %v32
  %v335 = vpop.permute.xlu0 %334
  %337 = vset.pattern.permute.xlu0 1
  %338 = vperm.xlu0 %337, %v33
  %v339 = vpop.permute.xlu0 %338
  %341 = vset.pattern.permute.xlu0 1
  %342 = vperm.xlu0 %341, %v34
  %v343 = vpop.permute.xlu0 %342
  %345 = vset.pattern.permute.xlu0 1
  %346 = vperm.xlu0 %345, %v35
  %v347 = vpop.permute.xlu0 %346
  %349 = vset.pattern.permute.xlu0 1
  %350 = vperm.xlu0 %349, %v36
  %v351 = vpop.permute.xlu0 %350
  %353 = vset.pattern.permute.xlu0 1
  %354 = vperm.xlu0 %353, %v37
  %v355 = vpop.permute.xlu0 %354
  %357 = vset.pattern.permute.xlu0 1
  %358 = vperm.xlu0 %357, %v38
  %v359 = vpop.permute.xlu0 %358
  %361 = vset.pattern.permute.xlu0 1
  %362 = vperm.xlu0 %361, %v39
  %v363 = vpop.permute.xlu0 %362
  %365 = vset.pattern.permute.xlu0 1
  %366 = vperm.xlu0 %365, %v40
  %v367 = vpop.permute.xlu0 %366
  %369 = vset.pattern.permute.xlu0 1
  %370 = vperm.xlu0 %369, %v41
  %v371 = vpop.permute.xlu0 %370
  %373 = vset.pattern.permute.xlu0 1
  %374 = vperm.xlu0 %373, %v42
  %v375 = vpop.permute.xlu0 %374
  %v377 = vperm.slane %v43, 1
  %v378 = vmul.f32 %v251, %v377
  %v379 = vmul.f32 %v255, %v377
  %v380 = vmul.f32 %v259, %v377
  %v381 = vmul.f32 %v263, %v377
  %v382 = vmul.f32 %v267, %v377
  %v383 = vmul.f32 %v271, %v377
  %v384 = vmul.f32 %v275, %v377
  %v385 = vmul.f32 %v279, %v377
  %v386 = vmul.f32 %v283, %v377
  %v387 = vmul.f32 %v287, %v377
  %v388 = vmul.f32 %v291, %v377
  %v389 = vmul.f32 %v295, %v377
  %v390 = vmul.f32 %v299, %v377
  %v391 = vmul.f32 %v303, %v377
  %v392 = vmul.f32 %v307, %v377
  %v393 = vmul.f32 %v311, %v377
  %v394 = vmul.f32 %v315, %v377
  %v395 = vmul.f32 %v319, %v377
  %v396 = vmul.f32 %v323, %v377
  %v397 = vmul.f32 %v327, %v377
  %v398 = vmul.f32 %v331, %v377
  %v399 = vmul.f32 %v335, %v377
  %v400 = vmul.f32 %v339, %v377
  %v401 = vmul.f32 %v343, %v377
  %v402 = vmul.f32 %v347, %v377
  %v403 = vmul.f32 %v351, %v377
  %v404 = vmul.f32 %v355, %v377
  %v405 = vmul.f32 %v359, %v377
  %v406 = vmul.f32 %v363, %v377
  %v407 = vmul.f32 %v367, %v377
  %v408 = vmul.f32 %v371, %v377
  %v409 = vmul.f32 %v375, %v377
  %v410 = vadd.f32 %v217, %v378
  %v411 = vadd.f32 %v218, %v379
  %v412 = vadd.f32 %v219, %v380
  %v413 = vadd.f32 %v220, %v381
  %v414 = vadd.f32 %v221, %v382
  %v415 = vadd.f32 %v222, %v383
  %v416 = vadd.f32 %v223, %v384
  %v417 = vadd.f32 %v224, %v385
  %v418 = vadd.f32 %v225, %v386
  %v419 = vadd.f32 %v226, %v387
  %v420 = vadd.f32 %v227, %v388
  %v421 = vadd.f32 %v228, %v389
  %v422 = vadd.f32 %v229, %v390
  %v423 = vadd.f32 %v230, %v391
  %v424 = vadd.f32 %v231, %v392
  %v425 = vadd.f32 %v232, %v393
  %v426 = vadd.f32 %v233, %v394
  %v427 = vadd.f32 %v234, %v395
  %v428 = vadd.f32 %v235, %v396
  %v429 = vadd.f32 %v236, %v397
  %v430 = vadd.f32 %v237, %v398
  %v431 = vadd.f32 %v238, %v399
  %v432 = vadd.f32 %v239, %v400
  %v433 = vadd.f32 %v240, %v401
  %v434 = vadd.f32 %v241, %v402
  %v435 = vadd.f32 %v242, %v403
  %v436 = vadd.f32 %v243, %v404
  %v437 = vadd.f32 %v244, %v405
  %v438 = vadd.f32 %v245, %v406
  %v439 = vadd.f32 %v246, %v407
  %v440 = vadd.f32 %v247, %v408
  %v441 = vadd.f32 %v248, %v409
  %v442 = vperm.slane %v44, 0
  %v443 = vadd.f32 %v410, %v442
  %v444 = vadd.f32 %v411, %v442
  %v445 = vadd.f32 %v412, %v442
  %v446 = vadd.f32 %v413, %v442
  %v447 = vadd.f32 %v414, %v442
  %v448 = vadd.f32 %v415, %v442
  %v449 = vadd.f32 %v416, %v442
  %v450 = vadd.f32 %v417, %v442
  %v451 = vadd.f32 %v418, %v442
  %v452 = vadd.f32 %v419, %v442
  %v453 = vadd.f32 %v420, %v442
  %v454 = vadd.f32 %v421, %v442
  %v455 = vadd.f32 %v422, %v442
  %v456 = vadd.f32 %v423, %v442
  %v457 = vadd.f32 %v424, %v442
  %v458 = vadd.f32 %v425, %v442
  %v459 = vadd.f32 %v426, %v442
  %v460 = vadd.f32 %v427, %v442
  %v461 = vadd.f32 %v428, %v442
  %v462 = vadd.f32 %v429, %v442
  %v463 = vadd.f32 %v430, %v442
  %v464 = vadd.f32 %v431, %v442
  %v465 = vadd.f32 %v432, %v442
  %v466 = vadd.f32 %v433, %v442
  %v467 = vadd.f32 %v434, %v442
  %v468 = vadd.f32 %v435, %v442
  %v469 = vadd.f32 %v436, %v442
  %v470 = vadd.f32 %v437, %v442
  %v471 = vadd.f32 %v438, %v442
  %v472 = vadd.f32 %v439, %v442
  %v473 = vadd.f32 %v440, %v442
  %v474 = vadd.f32 %v441, %v442
  %v475 = vmax.f32 %v443, 0.0
  %v476 = vmax.f32 %v444, 0.0
  %v477 = vmax.f32 %v445, 0.0
  %v478 = vmax.f32 %v446, 0.0
  %v479 = vmax.f32 %v447, 0.0
  %v480 = vmax.f32 %v448, 0.0
  %v481 = vmax.f32 %v449, 0.0
  %v482 = vmax.f32 %v450, 0.0
  %v483 = vmax.f32 %v451, 0.0
  %v484 = vmax.f32 %v452, 0.0
  %v485 = vmax.f32 %v453, 0.0
  %v486 = vmax.f32 %v454, 0.0
  %v487 = vmax.f32 %v455, 0.0
  %v488 = vmax.f32 %v456, 0.0
  %v489 = vmax.f32 %v457, 0.0
  %v490 = vmax.f32 %v458, 0.0
  %v491 = vmax.f32 %v459, 0.0
  %v492 = vmax.f32 %v460, 0.0
  %v493 = vmax.f32 %v461, 0.0
  %v494 = vmax.f32 %v462, 0.0
  %v495 = vmax.f32 %v463, 0.0
  %v496 = vmax.f32 %v464, 0.0
  %v497 = vmax.f32 %v465, 0.0
  %v498 = vmax.f32 %v466, 0.0
  %v499 = vmax.f32 %v467, 0.0
  %v500 = vmax.f32 %v468, 0.0
  %v501 = vmax.f32 %v469, 0.0
  %v502 = vmax.f32 %v470, 0.0
  %v503 = vmax.f32 %v471, 0.0
  %v504 = vmax.f32 %v472, 0.0
  %v505 = vmax.f32 %v473, 0.0
  %v506 = vmax.f32 %v474, 0.0
  %508 = vset.pattern.permute.xlu0 0
  %509 = vperm.xlu0 %508, %v54
  %v510 = vpop.permute.xlu0 %509
  %513 = vset.pattern.permute.xlu0 0
  %514 = vperm.xlu0 %513, %v55
  %v515 = vpop.permute.xlu0 %514
  %vm517 = vcmask 130048
  %v519 = vsel %vm517, %v45, 0
  %v522 = vsel %vm517, %v46, 0
  %v525 = vsel %vm517, %v475, 0
  %v528 = vsel %vm517, %v476, 0
  %v531 = vsel %vm517, %v477, 0
  %v534 = vsel %vm517, %v478, 0
  %v537 = vsel %vm517, %v479, 0
  %v540 = vsel %vm517, %v480, 0
  %v543 = vsel %vm517, %v481, 0
  %v546 = vsel %vm517, %v482, 0
  %v549 = vsel %vm517, %v483, 0
  %v552 = vsel %vm517, %v484, 0
  %v555 = vsel %vm517, %v485, 0
  %v558 = vsel %vm517, %v486, 0
  %v561 = vsel %vm517, %v487, 0
  %v564 = vsel %vm517, %v488, 0
  %v567 = vsel %vm517, %v489, 0
  %v570 = vsel %vm517, %v490, 0
  %v573 = vsel %vm517, %v491, 0
  %v576 = vsel %vm517, %v492, 0
  %v579 = vsel %vm517, %v493, 0
  %v582 = vsel %vm517, %v494, 0
  %v585 = vsel %vm517, %v495, 0
  %v588 = vsel %vm517, %v496, 0
  %v591 = vsel %vm517, %v497, 0
  %v594 = vsel %vm517, %v498, 0
  %v597 = vsel %vm517, %v499, 0
  %v600 = vsel %vm517, %v500, 0
  %v603 = vsel %vm517, %v501, 0
  %v606 = vsel %vm517, %v502, 0
  %v609 = vsel %vm517, %v503, 0
  %v612 = vsel %vm517, %v504, 0
  %v615 = vsel %vm517, %v505, 0
  %v618 = vsel %vm517, %v506, 0
  %620 = vmatpush.xpose.msra.mxu0 %v570
  %621 = vmatpush.xpose.msra.mxu0 %v567
  %622 = vmatpush.xpose.msra.mxu0 %v564
  %623 = vmatpush.xpose.msra.mxu0 %v561
  %624 = vmatpush.xpose.msra.mxu0 %v558
  %625 = vmatpush.xpose.msra.mxu0 %v555
  %626 = vmatpush.xpose.msra.mxu0 %v552
  %627 = vmatpush.xpose.msra.mxu0 %v549
  %628 = vmatpush.xpose.msra.mxu0 %v546
  %629 = vmatpush.xpose.msra.mxu0 %v543
  %630 = vmatpush.xpose.msra.mxu0 %v540
  %631 = vmatpush.xpose.msra.mxu0 %v537
  %632 = vmatpush.xpose.msra.mxu0 %v534
  %633 = vmatpush.xpose.msra.mxu0 %v531
  %634 = vmatpush.xpose.msra.mxu0 %v528
  %635 = vmatpush.xpose.msra.mxu0 %v525
  %636 = vmatmul.f32.gmra.mxu0 %v519
  %v637 = vpop.f32.mrf.mxu0
  %v638 = vadd.f32 %v510, %v637
  %639 = vmatmul.f32.gmra.mxu0 %v522
  %v640 = vpop.f32.mrf.mxu0
  %v641 = vadd.f32 %v515, %v640
  %642 = vdwg.mxu0
  %643 = vmatpush.xpose.msra.mxu0 %v618
  %644 = vmatpush.xpose.msra.mxu0 %v615
  %645 = vmatpush.xpose.msra.mxu0 %v612
  %646 = vmatpush.xpose.msra.mxu0 %v609
  %647 = vmatpush.xpose.msra.mxu0 %v606
  %648 = vmatpush.xpose.msra.mxu0 %v603
  %649 = vmatpush.xpose.msra.mxu0 %v600
  %650 = vmatpush.xpose.msra.mxu0 %v597
  %651 = vmatpush.xpose.msra.mxu0 %v594
  %652 = vmatpush.xpose.msra.mxu0 %v591
  %653 = vmatpush.xpose.msra.mxu0 %v588
  %654 = vmatpush.xpose.msra.mxu0 %v585
  %655 = vmatpush.xpose.msra.mxu0 %v582
  %656 = vmatpush.xpose.msra.mxu0 %v579
  %657 = vmatpush.xpose.msra.mxu0 %v576
  %658 = vmatpush.xpose.msra.mxu0 %v573
  %659 = vmatmul.f32.gmra.mxu0 %v519
  %v660 = vpop.f32.mrf.mxu0
  %v661 = vadd.f32 %v510, %v660
  %662 = vmatmul.f32.gmra.mxu0 %v522
  %v663 = vpop.f32.mrf.mxu0
  %v664 = vadd.f32 %v515, %v663
  %665 = vdwg.mxu0
  %v666 = vmax.f32 %v638, 0.0
  %v667 = vmax.f32 %v661, 0.0
  %v668 = vmax.f32 %v641, 0.0
  %v669 = vmax.f32 %v664, 0.0
  %670 = vset.pattern.permute.xlu0 1
  %671 = vperm.xlu0 %670, %v54
  %v672 = vpop.permute.xlu0 %671
  %674 = vset.pattern.permute.xlu0 1
  %675 = vperm.xlu0 %674, %v55
  %v676 = vpop.permute.xlu0 %675
  %v679 = vsel %vm517, %v47, 0
  %v682 = vsel %vm517, %v48, 0
  %684 = vmatpush.msra.mxu0 0.0
  %685 = vmatpush.msra.mxu0 0.0
  %686 = vmatpush.msra.mxu0 0.0
  %687 = vmatpush.msra.mxu0 0.0
  %688 = vmatpush.msra.mxu0 0.0
  %689 = vmatpush.msra.mxu0 0.0
  %690 = vmatpush.msra.mxu0 0.0
  %691 = vmatpush.msra.mxu0 0.0
  %692 = vmatpush.msra.mxu0 0.0
  %693 = vmatpush.msra.mxu0 0.0
  %694 = vmatpush.msra.mxu0 0.0
  %695 = vmatpush.msra.mxu0 0.0
  %696 = vmatpush.msra.mxu0 0.0
  %697 = vmatpush.msra.mxu0 0.0
  %698 = vmatpush.msra.mxu0 %v668
  %699 = vmatpush.msra.mxu0 %v666
  %700 = vmatmul.f32.gmra.mxu0 %v679
  %v701 = vpop.f32.mrf.mxu0
  %v702 = vadd.f32 %v672, %v701
  %703 = vmatmul.f32.gmra.mxu0 %v682
  %v704 = vpop.f32.mrf.mxu0
  %v705 = vadd.f32 %v676, %v704
  %706 = vdwg.mxu0
  %707 = vmatpush.msra.mxu0 0.0
  %708 = vmatpush.msra.mxu0 0.0
  %709 = vmatpush.msra.mxu0 0.0
  %710 = vmatpush.msra.mxu0 0.0
  %711 = vmatpush.msra.mxu0 0.0
  %712 = vmatpush.msra.mxu0 0.0
  %713 = vmatpush.msra.mxu0 0.0
  %714 = vmatpush.msra.mxu0 0.0
  %715 = vmatpush.msra.mxu0 0.0
  %716 = vmatpush.msra.mxu0 0.0
  %717 = vmatpush.msra.mxu0 0.0
  %718 = vmatpush.msra.mxu0 0.0
  %719 = vmatpush.msra.mxu0 0.0
  %720 = vmatpush.msra.mxu0 0.0
  %721 = vmatpush.msra.mxu0 %v669
  %722 = vmatpush.msra.mxu0 %v667
  %723 = vmatmul.f32.gmra.mxu0 %v679
  %v724 = vpop.f32.mrf.mxu0
  %v725 = vadd.f32 %v672, %v724
  %726 = vmatmul.f32.gmra.mxu0 %v682
  %v727 = vpop.f32.mrf.mxu0
  %v728 = vadd.f32 %v676, %v727
  %729 = vdwg.mxu0
  %v730 = vmax.f32 %v702, 0.0
  %v731 = vmax.f32 %v725, 0.0
  %v732 = vmax.f32 %v705, 0.0
  %v733 = vmax.f32 %v728, 0.0
  %734 = vset.pattern.permute.xlu0 2
  %735 = vperm.xlu0 %734, %v54
  %v736 = vpop.permute.xlu0 %735
  %738 = vset.pattern.permute.xlu0 2
  %739 = vperm.xlu0 %738, %v55
  %v740 = vpop.permute.xlu0 %739
  %v743 = vsel %vm517, %v49, 0
  %v746 = vsel %vm517, %v50, 0
  %748 = vmatpush.msra.mxu0 0.0
  %749 = vmatpush.msra.mxu0 0.0
  %750 = vmatpush.msra.mxu0 0.0
  %751 = vmatpush.msra.mxu0 0.0
  %752 = vmatpush.msra.mxu0 0.0
  %753 = vmatpush.msra.mxu0 0.0
  %754 = vmatpush.msra.mxu0 0.0
  %755 = vmatpush.msra.mxu0 0.0
  %756 = vmatpush.msra.mxu0 0.0
  %757 = vmatpush.msra.mxu0 0.0
  %758 = vmatpush.msra.mxu0 0.0
  %759 = vmatpush.msra.mxu0 0.0
  %760 = vmatpush.msra.mxu0 0.0
  %761 = vmatpush.msra.mxu0 0.0
  %762 = vmatpush.msra.mxu0 %v732
  %763 = vmatpush.msra.mxu0 %v730
  %764 = vmatmul.f32.gmra.mxu0 %v743
  %v765 = vpop.f32.mrf.mxu0
  %v766 = vadd.f32 %v736, %v765
  %767 = vmatmul.f32.gmra.mxu0 %v746
  %v768 = vpop.f32.mrf.mxu0
  %v769 = vadd.f32 %v740, %v768
  %770 = vdwg.mxu0
  %771 = vmatpush.msra.mxu0 0.0
  %772 = vmatpush.msra.mxu0 0.0
  %773 = vmatpush.msra.mxu0 0.0
  %774 = vmatpush.msra.mxu0 0.0
  %775 = vmatpush.msra.mxu0 0.0
  %776 = vmatpush.msra.mxu0 0.0
  %777 = vmatpush.msra.mxu0 0.0
  %778 = vmatpush.msra.mxu0 0.0
  %779 = vmatpush.msra.mxu0 0.0
  %780 = vmatpush.msra.mxu0 0.0
  %781 = vmatpush.msra.mxu0 0.0
  %782 = vmatpush.msra.mxu0 0.0
  %783 = vmatpush.msra.mxu0 0.0
  %784 = vmatpush.msra.mxu0 0.0
  %785 = vmatpush.msra.mxu0 %v733
  %786 = vmatpush.msra.mxu0 %v731
  %787 = vmatmul.f32.gmra.mxu0 %v743
  %v788 = vpop.f32.mrf.mxu0
  %v789 = vadd.f32 %v736, %v788
  %790 = vmatmul.f32.gmra.mxu0 %v746
  %v791 = vpop.f32.mrf.mxu0
  %v792 = vadd.f32 %v740, %v791
  %793 = vdwg.mxu0
  %v794 = vmax.f32 %v766, 0.0
  %v795 = vmax.f32 %v789, 0.0
  %v796 = vmax.f32 %v769, 0.0
  %v797 = vmax.f32 %v792, 0.0
  %798 = vset.pattern.permute.xlu0 3
  %799 = vperm.xlu0 %798, %v54
  %v800 = vpop.permute.xlu0 %799
  %802 = vset.pattern.permute.xlu0 3
  %803 = vperm.xlu0 %802, %v55
  %v804 = vpop.permute.xlu0 %803
  %v807 = vsel %vm517, %v51, 0
  %v810 = vsel %vm517, %v52, 0
  %812 = vmatpush.msra.mxu0 0.0
  %813 = vmatpush.msra.mxu0 0.0
  %814 = vmatpush.msra.mxu0 0.0
  %815 = vmatpush.msra.mxu0 0.0
  %816 = vmatpush.msra.mxu0 0.0
  %817 = vmatpush.msra.mxu0 0.0
  %818 = vmatpush.msra.mxu0 0.0
  %819 = vmatpush.msra.mxu0 0.0
  %820 = vmatpush.msra.mxu0 0.0
  %821 = vmatpush.msra.mxu0 0.0
  %822 = vmatpush.msra.mxu0 0.0
  %823 = vmatpush.msra.mxu0 0.0
  %824 = vmatpush.msra.mxu0 0.0
  %825 = vmatpush.msra.mxu0 0.0
  %826 = vmatpush.msra.mxu0 %v796
  %827 = vmatpush.msra.mxu0 %v794
  %828 = vmatmul.f32.gmra.mxu0 %v807
  %v829 = vpop.f32.mrf.mxu0
  %v830 = vadd.f32 %v800, %v829
  %831 = vmatmul.f32.gmra.mxu0 %v810
  %v832 = vpop.f32.mrf.mxu0
  %v833 = vadd.f32 %v804, %v832
  %834 = vdwg.mxu0
  %835 = vmatpush.msra.mxu0 0.0
  %836 = vmatpush.msra.mxu0 0.0
  %837 = vmatpush.msra.mxu0 0.0
  %838 = vmatpush.msra.mxu0 0.0
  %839 = vmatpush.msra.mxu0 0.0
  %840 = vmatpush.msra.mxu0 0.0
  %841 = vmatpush.msra.mxu0 0.0
  %842 = vmatpush.msra.mxu0 0.0
  %843 = vmatpush.msra.mxu0 0.0
  %844 = vmatpush.msra.mxu0 0.0
  %845 = vmatpush.msra.mxu0 0.0
  %846 = vmatpush.msra.mxu0 0.0
  %847 = vmatpush.msra.mxu0 0.0
  %848 = vmatpush.msra.mxu0 0.0
  %849 = vmatpush.msra.mxu0 %v797
  %850 = vmatpush.msra.mxu0 %v795
  %851 = vmatmul.f32.gmra.mxu0 %v807
  %v852 = vpop.f32.mrf.mxu0
  %v853 = vadd.f32 %v800, %v852
  %854 = vmatmul.f32.gmra.mxu0 %v810
  %v855 = vpop.f32.mrf.mxu0
  %v856 = vadd.f32 %v804, %v855
  %857 = vdwg.mxu0
  %v858 = vmax.f32 %v830, 0.0
  %v859 = vmax.f32 %v853, 0.0
  %v860 = vmax.f32 %v833, 0.0
  %v861 = vmax.f32 %v856, 0.0
  %862 = vset.pattern.permute.xlu0 4
  %863 = vperm.xlu0 %862, %v54
  %v864 = vpop.permute.xlu0 %863
  %v867 = vsel %vm517, %v53, 0
  %869 = vmatpush.msra.mxu0 0.0
  %870 = vmatpush.msra.mxu0 0.0
  %871 = vmatpush.msra.mxu0 0.0
  %872 = vmatpush.msra.mxu0 0.0
  %873 = vmatpush.msra.mxu0 0.0
  %874 = vmatpush.msra.mxu0 0.0
  %875 = vmatpush.msra.mxu0 0.0
  %876 = vmatpush.msra.mxu0 0.0
  %877 = vmatpush.msra.mxu0 0.0
  %878 = vmatpush.msra.mxu0 0.0
  %879 = vmatpush.msra.mxu0 0.0
  %880 = vmatpush.msra.mxu0 0.0
  %881 = vmatpush.msra.mxu0 0.0
  %882 = vmatpush.msra.mxu0 0.0
  %883 = vmatpush.msra.mxu0 %v860
  %884 = vmatpush.msra.mxu0 %v858
  %885 = vmatmul.f32.gmra.mxu0 %v867
  %v886 = vpop.f32.mrf.mxu0
  %v887 = vadd.f32 %v864, %v886
  %888 = vdwg.mxu0
  %889 = vmatpush.msra.mxu0 0.0
  %890 = vmatpush.msra.mxu0 0.0
  %891 = vmatpush.msra.mxu0 0.0
  %892 = vmatpush.msra.mxu0 0.0
  %893 = vmatpush.msra.mxu0 0.0
  %894 = vmatpush.msra.mxu0 0.0
  %895 = vmatpush.msra.mxu0 0.0
  %896 = vmatpush.msra.mxu0 0.0
  %897 = vmatpush.msra.mxu0 0.0
  %898 = vmatpush.msra.mxu0 0.0
  %899 = vmatpush.msra.mxu0 0.0
  %900 = vmatpush.msra.mxu0 0.0
  %901 = vmatpush.msra.mxu0 0.0
  %902 = vmatpush.msra.mxu0 0.0
  %903 = vmatpush.msra.mxu0 %v861
  %904 = vmatpush.msra.mxu0 %v859
  %905 = vmatmul.f32.gmra.mxu0 %v867
  %v906 = vpop.f32.mrf.mxu0
  %v907 = vadd.f32 %v864, %v906
  %908 = vdwg.mxu0
  %v909 = vrot.slane %v887, 4
  %v910 = vmax.f32 %v887, %v909
  %v911 = vrot.slane %v910, 2
  %v912 = vmax.f32 %v910, %v911
  %v913 = vrot.slane %v912, 1
  %v914 = vmax.f32 %v912, %v913
  %v915 = vrot.slane %v907, 4
  %v916 = vmax.f32 %v907, %v915
  %v917 = vrot.slane %v916, 2
  %v918 = vmax.f32 %v916, %v917
  %v919 = vrot.slane %v918, 1
  %v920 = vmax.f32 %v918, %v919
  %v921 = vsub.f32 %v887, %v914
  %v922 = vsub.f32 %v907, %v920
  %v923 = vmul.f32 %v921, 1.442695
  %v924 = vpow.pop %v923
  %v925 = vmul.f32 %v922, 1.442695
  %v926 = vpow.pop %v925
  %v927 = vrot.slane %v924, 4
  %v928 = vadd.f32 %v924, %v927
  %v929 = vrot.slane %v928, 2
  %v930 = vadd.f32 %v928, %v929
  %v931 = vrot.slane %v930, 1
  %v932 = vadd.f32 %v930, %v931
  %v933 = vrot.slane %v926, 4
  %v934 = vadd.f32 %v926, %v933
  %v935 = vrot.slane %v934, 2
  %v936 = vadd.f32 %v934, %v935
  %v937 = vrot.slane %v936, 1
  %v938 = vadd.f32 %v936, %v937
  %v939 = vrcp.pop %v932
  %v940 = vmul.f32 %v932, %v939
  %v941 = vsub.f32 1.0, %v940
  %v942 = vmul.f32 %v939, %v941
  %v943 = vadd.f32 %v939, %v942
  %vm944 = vweird.f32 %v932
  %vm945 = vweird.f32 %v939
  %vm946 = vmor %vm944, %vm945
  %v947 = vsel %vm946, %v939, %v943
  %v948 = vand.u32 2147483647, %v932
  %vm949 = vcmp.eq.f32.partialorder %v948, 8.507059e+37
  %v950 = vand.u32 %v932, 2147483648
  %v951 = vor.u32 1.1754944e-38, %v950
  %v952 = vsel %vm949, %v951, %v947
  %v953 = vmul.f32 %v924, %v952
  %v954 = vrcp.pop %v938
  %v955 = vmul.f32 %v938, %v954
  %v956 = vsub.f32 1.0, %v955
  %v957 = vmul.f32 %v954, %v956
  %v958 = vadd.f32 %v954, %v957
  %vm959 = vweird.f32 %v938
  %vm960 = vweird.f32 %v954
  %vm961 = vmor %vm959, %vm960
  %v962 = vsel %vm961, %v954, %v958
  %v963 = vand.u32 2147483647, %v938
  %vm964 = vcmp.eq.f32.partialorder %v963, 8.507059e+37
  %v965 = vand.u32 %v938, 2147483648
  %v966 = vor.u32 1.1754944e-38, %v965
  %v967 = vsel %vm964, %v966, %v962
  %v968 = vmul.f32 %v926, %v967
  %969 = vxpose.xlu0.b32.start [1/16] %v953, 128
  %970 = vxpose.xlu0.b32.cont [2/16] 0.0, 128
  %971 = vxpose.xlu0.b32.cont [3/16] 0.0, 128
  %972 = vxpose.xlu0.b32.cont [4/16] 0.0, 128
  %973 = vxpose.xlu0.b32.cont [5/16] 0.0, 128
  %974 = vxpose.xlu0.b32.cont [6/16] 0.0, 128
  %975 = vxpose.xlu0.b32.cont [7/16] 0.0, 128
  %976 = vxpose.xlu0.b32.cont [8/16] 0.0, 128
  %977 = vxpose.xlu0.b32.cont [9/16] 0.0, 128
  %978 = vxpose.xlu0.b32.cont [10/16] 0.0, 128
  %979 = vxpose.xlu0.b32.cont [11/16] 0.0, 128
  %980 = vxpose.xlu0.b32.cont [12/16] 0.0, 128
  %981 = vxpose.xlu0.b32.cont [13/16] 0.0, 128
  %982 = vxpose.xlu0.b32.cont [14/16] 0.0, 128
  %983 = vxpose.xlu0.b32.cont [15/16] 0.0, 128
  %984 = vxpose.xlu0.b32.end [16/16] 0.0, 128
  %v985 = vpop.trf.xlu0
  %v986 = vpop.trf.xlu0
  %v987 = vpop.trf.xlu0
  %v988 = vpop.trf.xlu0
  %v989 = vpop.trf.xlu0
  %v990 = vpop.trf.xlu0
  %v991 = vpop.trf.xlu0
  %v992 = vpop.trf.xlu0
  %v993 = vpop.trf.xlu0
  %v994 = vpop.trf.xlu0
  %v995 = vpop.trf.xlu0
  %v996 = vpop.trf.xlu0
  %v997 = vpop.trf.xlu0
  %v998 = vpop.trf.xlu0
  %v999 = vpop.trf.xlu0
  %v1000 = vpop.trf.xlu0
  %1001 = vxpose.xlu0.b32.start [1/16] %v968, 128
  %1002 = vxpose.xlu0.b32.cont [2/16] 0.0, 128
  %1003 = vxpose.xlu0.b32.cont [3/16] 0.0, 128
  %1004 = vxpose.xlu0.b32.cont [4/16] 0.0, 128
  %1005 = vxpose.xlu0.b32.cont [5/16] 0.0, 128
  %1006 = vxpose.xlu0.b32.cont [6/16] 0.0, 128
  %1007 = vxpose.xlu0.b32.cont [7/16] 0.0, 128
  %1008 = vxpose.xlu0.b32.cont [8/16] 0.0, 128
  %1009 = vxpose.xlu0.b32.cont [9/16] 0.0, 128
  %1010 = vxpose.xlu0.b32.cont [10/16] 0.0, 128
  %1011 = vxpose.xlu0.b32.cont [11/16] 0.0, 128
  %1012 = vxpose.xlu0.b32.cont [12/16] 0.0, 128
  %1013 = vxpose.xlu0.b32.cont [13/16] 0.0, 128
  %1014 = vxpose.xlu0.b32.cont [14/16] 0.0, 128
  %1015 = vxpose.xlu0.b32.cont [15/16] 0.0, 128
  %1016 = vxpose.xlu0.b32.end [16/16] 0.0, 128
  %v1017 = vpop.trf.xlu0
  %v1018 = vpop.trf.xlu0
  %v1019 = vpop.trf.xlu0
  %v1020 = vpop.trf.xlu0
  %v1021 = vpop.trf.xlu0
  %v1022 = vpop.trf.xlu0
  %v1023 = vpop.trf.xlu0
  %v1024 = vpop.trf.xlu0
  %v1025 = vpop.trf.xlu0
  %v1026 = vpop.trf.xlu0
  %v1027 = vpop.trf.xlu0
  %v1028 = vpop.trf.xlu0
  %v1029 = vpop.trf.xlu0
  %v1030 = vpop.trf.xlu0
  %v1031 = vpop.trf.xlu0
  %v1032 = vpop.trf.xlu0
  %vm1033 = vcmask 56320
  %1034 = vst.msk [vmem:[%s2] sm:$0xff] %vm1033, %v985
  %1035 = vst.msk [vmem:[%s2 + $0x8] sm:$0xff] %vm1033, %v986
  %1036 = vst.msk [vmem:[%s2 + $0x10] sm:$0xff] %vm1033, %v987
  %1037 = vst.msk [vmem:[%s2 + $0x18] sm:$0xff] %vm1033, %v988
  %1038 = vst.msk [vmem:[%s2 + $0x20] sm:$0xff] %vm1033, %v989
  %1039 = vst.msk [vmem:[%s2 + $0x28] sm:$0xff] %vm1033, %v990
  %1040 = vst.msk [vmem:[%s2 + $0x30] sm:$0xff] %vm1033, %v991
  %1041 = vst.msk [vmem:[%s2 + $0x38] sm:$0xff] %vm1033, %v992
  %1042 = vst.msk [vmem:[%s2 + $0x40] sm:$0xff] %vm1033, %v993
  %1043 = vst.msk [vmem:[%s2 + $0x48] sm:$0xff] %vm1033, %v994
  %1044 = vst.msk [vmem:[%s2 + $0x50] sm:$0xff] %vm1033, %v995
  %1045 = vst.msk [vmem:[%s2 + $0x58] sm:$0xff] %vm1033, %v996
  %1046 = vst.msk [vmem:[%s2 + $0x60] sm:$0xff] %vm1033, %v997
  %1047 = vst.msk [vmem:[%s2 + $0x68] sm:$0xff] %vm1033, %v998
  %1048 = vst.msk [vmem:[%s2 + $0x70] sm:$0xff] %vm1033, %v999
  %1049 = vst.msk [vmem:[%s2 + $0x78] sm:$0xff] %vm1033, %v1000
  %1050 = vst.msk [vmem:[%s2 + $0x80] sm:$0xff] %vm1033, %v1017
  %1051 = vst.msk [vmem:[%s2 + $0x88] sm:$0xff] %vm1033, %v1018
  %1052 = vst.msk [vmem:[%s2 + $0x90] sm:$0xff] %vm1033, %v1019
  %1053 = vst.msk [vmem:[%s2 + $0x98] sm:$0xff] %vm1033, %v1020
  %1054 = vst.msk [vmem:[%s2 + $0xa0] sm:$0xff] %vm1033, %v1021
  %1055 = vst.msk [vmem:[%s2 + $0xa8] sm:$0xff] %vm1033, %v1022
  %1056 = vst.msk [vmem:[%s2 + $0xb0] sm:$0xff] %vm1033, %v1023
  %1057 = vst.msk [vmem:[%s2 + $0xb8] sm:$0xff] %vm1033, %v1024
  %1058 = vst.msk [vmem:[%s2 + $0xc0] sm:$0xff] %vm1033, %v1025
  %1059 = vst.msk [vmem:[%s2 + $0xc8] sm:$0xff] %vm1033, %v1026
  %1060 = vst.msk [vmem:[%s2 + $0xd0] sm:$0xff] %vm1033, %v1027
  %1061 = vst.msk [vmem:[%s2 + $0xd8] sm:$0xff] %vm1033, %v1028
  %1062 = vst.msk [vmem:[%s2 + $0xe0] sm:$0xff] %vm1033, %v1029
  %1063 = vst.msk [vmem:[%s2 + $0xe8] sm:$0xff] %vm1033, %v1030
  %1064 = vst.msk [vmem:[%s2 + $0xf0] sm:$0xff] %vm1033, %v1031
  %1065 = vst.msk [vmem:[%s2 + $0xf8] sm:$0xff] %vm1033, %v1032
  // Predicated region
  $region10: #{_forward_impl.1} parent=0 // pred_check
    _
  $region11: #{_forward_impl.1} parent=0 // pred_check_branch
    %1067 = sbr.rel (0) target = $region13
  $region12: #{_forward_impl.1} parent=0 // pred_region
    _
  $region13: #{_forward_impl.1} parent=0 // pred_fallthru
    _
  // Predicated region
  $region14: #{_forward_impl.1} parent=0 // pred_check
    _
  $region15: #{_forward_impl.1} parent=0 // pred_check_branch
    %1069 = sbr.rel (0) target = $region17
  $region16: #{_forward_impl.1} parent=0 // pred_region
    _
  $region17: #{_forward_impl.1} parent=0 // pred_fallthru
    _

</llo_original>
